<compile_context>
chip_gen: v6e
topology: v6e:2x2x1
jax: 0.10.0
libtpu: 0.0.40
codegen_flags: <defaults>
</compile_context>

<pallas_src>
import functools

import numpy as np
import jax
import jax.numpy as jnp
from jax.experimental import pallas as pl
from jax.experimental.pallas import tpu as pltpu


_NUM_CORES = 2           # parallel grid axis; v7x has 2 TCs, harmless elsewhere
_ROW_ALIGN = 32          # int8 sublane tiling => row tiles must be 32-aligned
_MAX_TILE_ROWS = 4096    # 4096 x 128 x 4B = 2 MiB per f32 input tile
_NUM_ACC_ROWS = 16       # 10 reduced quantities, padded to 2 f32 sublane tiles


def _midam_kernel(params_ref, s_ref, yp_ref, lbl_ref, acc_ref):
    # params_ref (SMEM, f32[1]): [gamma]
    gamma = params_ref[0]

    yp = yp_ref[...]                                 # (T, 128) predictions
    vs = (1.0 - gamma) * s_ref[...] + gamma * yp     # fused moving-average pool
    gw = yp / vs                                     # y_pred / s  (exact div)
    logs = jnp.log(vs)                               # raw log; tau in epilogue

    lbl = lbl_ref[...].astype(jnp.float32)           # int8 labels, pad = -1
    mp = jnp.where(lbl == 1.0, 1.0, 0.0)             # positive-bag mask
    mn = jnp.where(lbl == 0.0, 1.0, 0.0)             # negative-bag mask

    mgw_p = mp * gw
    mgw_n = mn * gw
    mls_p = mp * logs
    mls_n = mn * logs

    def colsum(x):                                   # (T,128) -> (1,128)
        return jnp.sum(x, axis=0, keepdims=True)

    partial = jnp.concatenate(
        [
            colsum(mp),                # 0: count positives
            colsum(mn),                # 1: count negatives
            colsum(mgw_p),             # 2: sum_p gw
            colsum(mgw_n),             # 3: sum_n gw
            colsum(mgw_p * logs),      # 4: sum_p gw*log
            colsum(mgw_n * logs),      # 5: sum_n gw*log
            colsum(mls_p),             # 6: sum_p log
            colsum(mls_n),             # 7: sum_n log
            colsum(mls_p * logs),      # 8: sum_p log^2
            colsum(mls_n * logs),      # 9: sum_n log^2
            jnp.zeros((_NUM_ACC_ROWS - 10, 128), jnp.float32),
        ],
        axis=0,
    )

    @pl.when(pl.program_id(1) == 0)                  # first tile of this core
    def _():
        acc_ref[...] = jnp.zeros_like(acc_ref)

    acc_ref[...] += partial                          # single dense (16,128) RMW


def _midam_pallas(params, s_rows, yp_rows, lbl_rows, tile_rows, tiles_per_core):
    def data_map(c, i, prm):
        return (c * tiles_per_core + i, 0)

    def acc_map(c, i, prm):
        return (c, 0)                                # per-core accumulator slab

    return pl.pallas_call(
        _midam_kernel,
        out_shape=jax.ShapeDtypeStruct(
            (_NUM_CORES * _NUM_ACC_ROWS, 128), jnp.float32),
        grid_spec=pltpu.PrefetchScalarGridSpec(
            num_scalar_prefetch=1,                   # [gamma] -> SMEM
            grid=(_NUM_CORES, tiles_per_core),
            in_specs=[
                pl.BlockSpec((tile_rows, 128), data_map),   # s[ids]   (f32)
                pl.BlockSpec((tile_rows, 128), data_map),   # y_pred   (f32)
                pl.BlockSpec((tile_rows, 128), data_map),   # labels   (int8)
            ],
            out_specs=pl.BlockSpec((_NUM_ACC_ROWS, 128), acc_map),
        ),
        compiler_params=pltpu.CompilerParams(
            dimension_semantics=("parallel", "arbitrary"),
            vmem_limit_bytes=32 * 1024 * 1024,       # safe on v5e/v6e/v7x
        ),
    )(params, s_rows, yp_rows, lbl_rows)


@functools.partial(jax.jit,
                   static_argnames=("n", "tile_rows", "tiles_per_core"))
def _midam_step(y_pred, y_true, ids, s, a, b, alpha, gamma, tau, margin, eta,
                *, n, tile_rows, tiles_per_core):
    yp = y_pred.reshape(n).astype(jnp.float32)
    lbl = y_true.reshape(n).astype(jnp.int8)
    s_ids = s[ids].reshape(n)

    rows = _NUM_CORES * tiles_per_core * tile_rows
    total = rows * 128
    pad = total - n

    def pad_to(x, fill, dtype):
        # neutral padding: vs=1 -> log=0, gw=1, masks=0 -> no NaN/inf leak
        if pad == 0:
            return x.reshape(rows, 128)
        return jnp.concatenate(
            [x, jnp.full((pad,), fill, dtype)]).reshape(rows, 128)

    s_rows = pad_to(s_ids, 1.0, jnp.float32)
    yp_rows = pad_to(yp, 1.0, jnp.float32)
    lbl_rows = pad_to(lbl, -1, jnp.int8)

    params = jnp.asarray(gamma, jnp.float32).reshape(1)

    acc = _midam_pallas(params, s_rows, yp_rows, lbl_rows,
                        tile_rows, tiles_per_core)

    # Moving-average update + scatter stay in XLA (data-dependent indices);
    # recomputing vs here fuses with the scatter and reuses s_ids / yp.
    # TODO(synk): duplicate entries in `ids` are last-write-wins here, whereas
    # the PyTorch reference reads back the post-update value for all
    # duplicates; assumes ids are unique within a batch.
    vs = (1.0 - gamma) * s_ids + gamma * yp
    s_new = s.at[ids].set(vs.reshape(n, 1))

    # Final lane + per-core reduction of the raw moments.
    sums = jnp.sum(acc.reshape(_NUM_CORES, _NUM_ACC_ROWS, 128), axis=(0, 2))
    cnt_p, cnt_n = sums[0], sums[1]
    sg_p, sg_n = sums[2], sums[3]         # sum gw
    slg_p, slg_n = sums[4], sums[5]       # sum gw * log
    sl_p, sl_n = sums[6], sums[7]         # sum log
    sll_p, sll_n = sums[8], sums[9]       # sum log^2

    a_s, b_s, alpha_s = a[0], b[0], alpha[0]
    # NOTE: assumes the batch contains at least one positive and one negative
    # bag (same requirement as the PyTorch reference).
    gw_p = 2.0 * tau * (tau * slg_p - a_s * sg_p) / cnt_p
    gw_n = 2.0 * tau * (tau * slg_n - b_s * sg_n) / cnt_n
    gw_s = alpha_s * tau * (sg_n / cnt_n - sg_p / cnt_p)
    ga = (tau * tau * sll_p - 2.0 * a_s * tau * sl_p + a_s * a_s * cnt_p) / cnt_p
    gb = (tau * tau * sll_n - 2.0 * b_s * tau * sl_n + b_s * b_s * cnt_n) / cnt_n
    loss = gw_p + gw_n + gw_s + ga + gb

    mean_logs_p = tau * sl_p / cnt_p
    mean_logs_n = tau * sl_n / cnt_n
    g_alpha = margin + mean_logs_n - mean_logs_p - alpha_s
    alpha_new = jnp.maximum(alpha + eta * g_alpha, 0.0)
    return loss, s_new, alpha_new


class MIDAMSoftmaxPoolingLossPallas:
    """JAX/Pallas port of MIDAM_softmax_pooling_loss (forward semantics)."""

    def __init__(self, data_len, margin=0.5, tau=0.1, gamma=0.9, eta=1.0):
        self.gamma = float(gamma)
        self.eta = float(eta)
        self.tau = float(tau)
        self.margin = float(margin)
        self.data_len = int(data_len)
        self.s = jnp.zeros((data_len, 1), jnp.float32)
        self.a = jnp.zeros((1,), jnp.float32)
        self.b = jnp.zeros((1,), jnp.float32)
        self.alpha = jnp.zeros((1,), jnp.float32)

    def update_smoothing(self, decay_factor):
        self.gamma = self.gamma / decay_factor
        self.eta = self.eta / decay_factor

    def __call__(self, y_pred, y_true, ids):
        n = int(y_pred.shape[0])
        rows = -(-n // 128)                                   # 128 lanes / row
        rows_per_core = -(-rows // _NUM_CORES)
        rows_per_core = max(_ROW_ALIGN,
                            -(-rows_per_core // _ROW_ALIGN) * _ROW_ALIGN)
        tile_rows = min(_MAX_TILE_ROWS, rows_per_core)
        tiles_per_core = -(-rows_per_core // tile_rows)

        loss, s_new, alpha_new = _midam_step(
            y_pred, y_true, ids, self.s, self.a, self.b, self.alpha,
            jnp.float32(self.gamma), jnp.float32(self.tau),
            jnp.float32(self.margin), jnp.float32(self.eta),
            n=n, tile_rows=tile_rows, tiles_per_core=tiles_per_core)
        self.s = s_new
        self.alpha = alpha_new
        return loss


def _numpy_reference(y_pred, y_true, ids, s0, a, b, alpha, gamma, tau):
    y_pred = np.asarray(y_pred, np.float64).reshape(-1)
    y_true = np.asarray(y_true).reshape(-1)
    ids = np.asarray(ids)
    s = np.asarray(s0, np.float64).reshape(-1).copy()
    s[ids] = (1.0 - gamma) * s[ids] + gamma * y_pred
    vs = s[ids]
    mp = y_true == 1
    mn = y_true == 0
    s_p, s_n = vs[mp], vs[mn]
    logs_p = tau * np.log(s_p)
    logs_n = tau * np.log(s_n)
    gw_ins_p = y_pred[mp] / s_p
    gw_ins_n = y_pred[mn] / s_n
    gw_p = np.mean(2.0 * tau * (logs_p - a) * gw_ins_p)
    gw_n = np.mean(2.0 * tau * (logs_n - b) * gw_ins_n)
    gw_s = alpha * tau * (np.mean(gw_ins_n) - np.mean(gw_ins_p))
    ga = np.mean((logs_p - a) ** 2)
    gb = np.mean((logs_n - b) ** 2)
    return gw_p + gw_n + gw_s + ga + gb


if __name__ == "__main__":
    key = jax.random.PRNGKey(0)
    k1, k2 = jax.random.split(key)

    data_len = 64
    batch = 32
    # predictions are pooled sigmoid-style scores (must be > 0 for log)
    y_pred = jax.nn.sigmoid(jax.random.normal(k1, (batch, 1), jnp.float32))
    y_true = (jax.random.uniform(k2, (batch,)) > 0.5).astype(jnp.int32)
    y_true = y_true.at[0].set(1).at[1].set(0)   # guarantee both classes
    ids = jnp.arange(batch, dtype=jnp.int32)

    loss_fn = MIDAMSoftmaxPoolingLossPallas(data_len=data_len,
                                            margin=0.5, tau=0.1,
                                            gamma=0.9, eta=1.0)
    loss = loss_fn(y_pred, y_true, ids)
    loss = jax.block_until_ready(loss)

    ref = _numpy_reference(y_pred, y_true, ids,
                           np.zeros((data_len, 1), np.float32),
                           a=0.0, b=0.0, alpha=0.0,
                           gamma=0.9, tau=0.1)
    assert np.isfinite(float(loss))
    assert np.allclose(float(loss), float(ref), rtol=1e-4, atol=1e-5), (loss, ref)

    print("KERNEL_OK")
</pallas_src>

<mosaic_0001>
module attributes {stable_mosaic.version = 11 : i64} {
  func.func @_midam_kernel(%arg0: i32, %arg1: i32, %arg2: memref<1xf32, #tpu.memory_space<smem>>, %arg3: memref<32x128xf32, #tpu.memory_space<vmem>>, %arg4: memref<32x128xf32, #tpu.memory_space<vmem>>, %arg5: memref<32x128xi8, #tpu.memory_space<vmem>>, %arg6: memref<16x128xf32, #tpu.memory_space<vmem>>) attributes {dimension_semantics = [#tpu.dimension_semantics<parallel>, #tpu.dimension_semantics<arbitrary>], iteration_bounds = array<i64: 2, 1>, scalar_prefetch = 1 : i64, scratch_operands = 0 : i64, tpu.core_type = #tpu.core_type<tc>, window_params = [{transform_indices = @transform_0, window_bounds = array<i64: 32, 128>}, {transform_indices = @transform_1, window_bounds = array<i64: 32, 128>}, {transform_indices = @transform_2, window_bounds = array<i64: 32, 128>}, {transform_indices = @transform_3, window_bounds = array<i64: 16, 128>}]} {
    %c0 = arith.constant 0 : index
    %0 = memref.load %arg2[%c0] : memref<1xf32, #tpu.memory_space<smem>>
    %c0_0 = arith.constant 0 : index
    %c0_1 = arith.constant 0 : index
    %1 = vector.load %arg4[%c0_0, %c0_1] : memref<32x128xf32, #tpu.memory_space<vmem>>, vector<32x128xf32>
    %cst = arith.constant 1.000000e+00 : f32
    %2 = arith.subf %cst, %0 : f32
    %c0_2 = arith.constant 0 : index
    %c0_3 = arith.constant 0 : index
    %3 = vector.load %arg3[%c0_2, %c0_3] : memref<32x128xf32, #tpu.memory_space<vmem>>, vector<32x128xf32>
    %4 = vector.broadcast %2 : f32 to vector<32x128xf32>
    %5 = arith.mulf %4, %3 : vector<32x128xf32>
    %6 = vector.broadcast %0 : f32 to vector<32x128xf32>
    %7 = arith.mulf %6, %1 : vector<32x128xf32>
    %8 = arith.addf %5, %7 : vector<32x128xf32>
    %9 = arith.divf %1, %8 : vector<32x128xf32>
    %10 = math.log %8 : vector<32x128xf32>
    %c0_4 = arith.constant 0 : index
    %c0_5 = arith.constant 0 : index
    %11 = vector.load %arg5[%c0_4, %c0_5] : memref<32x128xi8, #tpu.memory_space<vmem>>, vector<32x128xi8>
    %12 = arith.sitofp %11 : vector<32x128xi8> to vector<32x128xf32>
    %cst_6 = arith.constant 1.000000e+00 : f32
    %13 = vector.broadcast %cst_6 : f32 to vector<32x128xf32>
    %14 = arith.cmpf oeq, %12, %13 : vector<32x128xf32>
    %cst_7 = arith.constant 1.000000e+00 : f32
    %cst_8 = arith.constant 0.000000e+00 : f32
    %15 = vector.broadcast %cst_7 : f32 to vector<32x128xf32>
    %16 = vector.broadcast %cst_8 : f32 to vector<32x128xf32>
    %17 = arith.select %14, %15, %16 : vector<32x128xi1>, vector<32x128xf32>
    %cst_9 = arith.constant 0.000000e+00 : f32
    %18 = vector.broadcast %cst_9 : f32 to vector<32x128xf32>
    %19 = arith.cmpf oeq, %12, %18 : vector<32x128xf32>
    %cst_10 = arith.constant 1.000000e+00 : f32
    %cst_11 = arith.constant 0.000000e+00 : f32
    %20 = vector.broadcast %cst_10 : f32 to vector<32x128xf32>
    %21 = vector.broadcast %cst_11 : f32 to vector<32x128xf32>
    %22 = arith.select %19, %20, %21 : vector<32x128xi1>, vector<32x128xf32>
    %23 = arith.mulf %17, %9 : vector<32x128xf32>
    %24 = arith.mulf %22, %9 : vector<32x128xf32>
    %25 = arith.mulf %17, %10 : vector<32x128xf32>
    %26 = arith.mulf %22, %10 : vector<32x128xf32>
    %cst_12 = arith.constant dense<0.000000e+00> : vector<128xf32>
    %27 = vector.multi_reduction <add>, %17, %cst_12 [0] : vector<32x128xf32> to vector<128xf32>
    %28 = vector.shape_cast %27 : vector<128xf32> to vector<1x128xf32>
    %cst_13 = arith.constant dense<0.000000e+00> : vector<128xf32>
    %29 = vector.multi_reduction <add>, %22, %cst_13 [0] : vector<32x128xf32> to vector<128xf32>
    %30 = vector.shape_cast %29 : vector<128xf32> to vector<1x128xf32>
    %cst_14 = arith.constant dense<0.000000e+00> : vector<128xf32>
    %31 = vector.multi_reduction <add>, %23, %cst_14 [0] : vector<32x128xf32> to vector<128xf32>
    %32 = vector.shape_cast %31 : vector<128xf32> to vector<1x128xf32>
    %cst_15 = arith.constant dense<0.000000e+00> : vector<128xf32>
    %33 = vector.multi_reduction <add>, %24, %cst_15 [0] : vector<32x128xf32> to vector<128xf32>
    %34 = vector.shape_cast %33 : vector<128xf32> to vector<1x128xf32>
    %35 = arith.mulf %23, %10 : vector<32x128xf32>
    %cst_16 = arith.constant dense<0.000000e+00> : vector<128xf32>
    %36 = vector.multi_reduction <add>, %35, %cst_16 [0] : vector<32x128xf32> to vector<128xf32>
    %37 = vector.shape_cast %36 : vector<128xf32> to vector<1x128xf32>
    %38 = arith.mulf %24, %10 : vector<32x128xf32>
    %cst_17 = arith.constant dense<0.000000e+00> : vector<128xf32>
    %39 = vector.multi_reduction <add>, %38, %cst_17 [0] : vector<32x128xf32> to vector<128xf32>
    %40 = vector.shape_cast %39 : vector<128xf32> to vector<1x128xf32>
    %cst_18 = arith.constant dense<0.000000e+00> : vector<128xf32>
    %41 = vector.multi_reduction <add>, %25, %cst_18 [0] : vector<32x128xf32> to vector<128xf32>
    %42 = vector.shape_cast %41 : vector<128xf32> to vector<1x128xf32>
    %cst_19 = arith.constant dense<0.000000e+00> : vector<128xf32>
    %43 = vector.multi_reduction <add>, %26, %cst_19 [0] : vector<32x128xf32> to vector<128xf32>
    %44 = vector.shape_cast %43 : vector<128xf32> to vector<1x128xf32>
    %45 = arith.mulf %25, %10 : vector<32x128xf32>
    %cst_20 = arith.constant dense<0.000000e+00> : vector<128xf32>
    %46 = vector.multi_reduction <add>, %45, %cst_20 [0] : vector<32x128xf32> to vector<128xf32>
    %47 = vector.shape_cast %46 : vector<128xf32> to vector<1x128xf32>
    %48 = arith.mulf %26, %10 : vector<32x128xf32>
    %cst_21 = arith.constant dense<0.000000e+00> : vector<128xf32>
    %49 = vector.multi_reduction <add>, %48, %cst_21 [0] : vector<32x128xf32> to vector<128xf32>
    %50 = vector.shape_cast %49 : vector<128xf32> to vector<1x128xf32>
    %cst_22 = arith.constant 0.000000e+00 : f32
    %51 = vector.broadcast %cst_22 : f32 to vector<6x128xf32>
    %52 = tpu.concatenate %28, %30, %32, %34, %37, %40, %42, %44, %47, %50, %51 in 0 : vector<1x128xf32>, vector<1x128xf32>, vector<1x128xf32>, vector<1x128xf32>, vector<1x128xf32>, vector<1x128xf32>, vector<1x128xf32>, vector<1x128xf32>, vector<1x128xf32>, vector<1x128xf32>, vector<6x128xf32> -> vector<16x128xf32>
    %c0_i32 = arith.constant 0 : i32
    %53 = arith.cmpi eq, %arg1, %c0_i32 : i32
    %54 = arith.extui %53 : i1 to i32
    %c0_i32_23 = arith.constant 0 : i32
    %55 = arith.cmpi ne, %54, %c0_i32_23 : i32
    scf.if %55 {
      %cst_28 = arith.constant 0.000000e+00 : f32
      %59 = vector.broadcast %cst_28 : f32 to vector<16x128xf32>
      %c0_29 = arith.constant 0 : index
      %c0_30 = arith.constant 0 : index
      %60 = vector.load %arg6[%c0_29, %c0_30] : memref<16x128xf32, #tpu.memory_space<vmem>>, vector<16x128xf32>
      tpu.vector_store %arg6[%c0_29, %c0_30], %59 {strides = array<i32>} : memref<16x128xf32, #tpu.memory_space<vmem>>, vector<16x128xf32>,
    } else {
    }
    %c0_24 = arith.constant 0 : index
    %c0_25 = arith.constant 0 : index
    %56 = vector.load %arg6[%c0_24, %c0_25] : memref<16x128xf32, #tpu.memory_space<vmem>>, vector<16x128xf32>
    %57 = arith.addf %56, %52 : vector<16x128xf32>
    %c0_26 = arith.constant 0 : index
    %c0_27 = arith.constant 0 : index
    %58 = vector.load %arg6[%c0_26, %c0_27] : memref<16x128xf32, #tpu.memory_space<vmem>>, vector<16x128xf32>
    tpu.vector_store %arg6[%c0_26, %c0_27], %57 {strides = array<i32>} : memref<16x128xf32, #tpu.memory_space<vmem>>, vector<16x128xf32>,
    return
  }
  func.func @transform_0(%arg0: i32, %arg1: i32, %arg2: memref<1xf32, #tpu.memory_space<smem>>) -> (i32, i32) {
    %c1_i32 = arith.constant 1 : i32
    %0 = arith.muli %arg0, %c1_i32 : i32
    %1 = arith.addi %0, %arg1 : i32
    %c0_i32 = arith.constant 0 : i32
    %c0_i32_0 = arith.constant 0 : i32
    return %1, %c0_i32 : i32, i32
  }
  func.func @transform_1(%arg0: i32, %arg1: i32, %arg2: memref<1xf32, #tpu.memory_space<smem>>) -> (i32, i32) {
    %c1_i32 = arith.constant 1 : i32
    %0 = arith.muli %arg0, %c1_i32 : i32
    %1 = arith.addi %0, %arg1 : i32
    %c0_i32 = arith.constant 0 : i32
    %c0_i32_0 = arith.constant 0 : i32
    return %1, %c0_i32 : i32, i32
  }
  func.func @transform_2(%arg0: i32, %arg1: i32, %arg2: memref<1xf32, #tpu.memory_space<smem>>) -> (i32, i32) {
    %c1_i32 = arith.constant 1 : i32
    %0 = arith.muli %arg0, %c1_i32 : i32
    %1 = arith.addi %0, %arg1 : i32
    %c0_i32 = arith.constant 0 : i32
    %c0_i32_0 = arith.constant 0 : i32
    return %1, %c0_i32 : i32, i32
  }
  func.func @transform_3(%arg0: i32, %arg1: i32, %arg2: memref<1xf32, #tpu.memory_space<smem>>) -> (i32, i32) {
    %c0_i32 = arith.constant 0 : i32
    %c0_i32_0 = arith.constant 0 : i32
    return %arg0, %c0_i32 : i32, i32
  }
}

</mosaic_0001>

<llo_original>
// kernel: _midam_step.1
$region0: #{_midam_step.1}
  #allocation0 [shape = 'u32[]', space=smem, size = 0x4, offset = 0x4, fixed_abs, tag = 'smem constant byte address 0x4 - core index']
  #allocation1 [shape = 'u32[144,128]{1,0:T(1,128)}', space=vmem, size = 0x12000, scoped, tag = 'internal scratch']
  #allocation2 [shape = 's32[1]{0}', space=sflag, size = 0x4, scoped, tag = 'scoped memory for _midam_step.1']
  #allocation3 [shape = 'f32[1]{0:T(128)S(6)}', space=smem, size = 0x200, scoped, tag = 'prefetched SMEM operand 0']
  %s0 = inlined_call_operand.<no memory space> [shape: f32[1], index: 0, kind: input, shape index: {}]
  %s1 = inlined_call_operand.vmem [shape: f32[64,128], index: 1, kind: input, shape index: {}]
  %s2 = inlined_call_operand.vmem [shape: f32[64,128], index: 2, kind: input, shape index: {}]
  %s3 = inlined_call_operand.vmem [shape: s8[64,128], index: 3, kind: input, shape index: {}]
  %s4 = inlined_call_operand.vmem [shape: f32[32,128], index: 4, kind: output, shape index: {}]
  %s5 = sld [smem:[#allocation0]]
  $region49: #{_midam_step.1} parent=0
    _
  %s7 = ssub.s32 1, %s5
  %s8 = scalar_select 0, %s7, %s5
  %9 = sst [smem:[#allocation3]] %s0
  loop: start=0, step=1, limit=4
  $region2: #{_midam_step.1} parent=0 // loop_pre_header
    _
  $region3: #{_midam_step.1} parent=0 // loop_header
    %s11 = sphi 0, %s15
    %p12 = scmp.ge.s32.totalorder %s11, 4
    %s18 = sphi 0, %s30
    %s19 = sphi 0, %s26
    %s20 = sphi 0, %s18
    %s21 = sphi 0, %s19
    %s22 = sphi 0, %s20
    %s23 = sphi 0, %s21
    %s35 = sphi 0, %s37
    %s38 = sphi 0, %s35
    %s39 = sphi 0, %s38
    %s55 = sphi 0, %s39
    %s63 = sphi 0, %s65
    %s66 = sphi 0, %s63
    %s67 = sphi 0, %s66
    %s83 = sphi 0, %s67
    %s91 = sphi 0, %s93
    %s94 = sphi 0, %s91
    %s95 = sphi 0, %s94
    %s111 = sphi 0, %s95
    %s117 = sphi 0, %s119
    %s120 = sphi 0, %s117
    %s121 = sphi 0, %s120
    %s137 = sphi 0, %s121
  $region4: #{_midam_step.1} parent=0 // loop_header_branch
    %14 = sbr.rel (%p12) target = $region8
  $region5: #{_midam_step.1} parent=0 // loop_body
    %s16 = ssub.s32 %s11, 1
    %s17 = ssub.s32 %s11, 2
    %s24 = sadd.s32 1, %s19
    %p25 = scmp.ge.s32.totalorder %s24, 1
    %s26 = scalar_select %p25, 0, %s24
    %s27 = sadd.s32 1, %s18
    %s28 = scalar_select %p25, %s27, %s18
    %p29 = scmp.ge.s32.totalorder %s28, 2
    %s30 = scalar_select %p29, 0, %s28
    %s31 = sadd.s32 %s18, %s19
    %s32 = sadd.s32 %s30, %s26
    %s33 = ssub.s32 %s31, %s32
    %p34 = scmp.eq.s32.totalorder %s33, 0
    %s36 = sadd.s32 %s35, 1
    %s37 = scalar_select %p34, %s35, %s36
    %p40 = pneg %p34
    %p41 = scmp.eq.s32.totalorder %s11, 1
    %p42 = por %p40, %p41
    %p43 = scmp.ne.s32.totalorder %s35, %s38
    %p44 = scmp.eq.s32.totalorder %s11, 0
    %p45 = por %p43, %p44
    %p46 = scmp.ne.s32.totalorder %s35, %s38
    %p47 = scmp.eq.s32.totalorder %s16, 1
    %p48 = por %p46, %p47
    %p49 = scmp.ne.s32.totalorder %s38, %s39
    %p50 = scmp.eq.s32.totalorder %s16, 0
    %p51 = por %p49, %p50
    %p52 = scmp.ne.s32.totalorder %s38, %s39
    %p53 = scmp.eq.s32.totalorder %s17, 1
    %p54 = por %p52, %p53
    %p56 = scmp.ne.s32.totalorder %s39, %s55
    %p57 = scmp.eq.s32.totalorder %s17, 0
    %p58 = por %p56, %p57
    %s59 = sadd.s32 %s18, %s19
    %s60 = sadd.s32 %s30, %s26
    %s61 = ssub.s32 %s59, %s60
    %p62 = scmp.eq.s32.totalorder %s61, 0
    %s64 = sadd.s32 %s63, 1
    %s65 = scalar_select %p62, %s63, %s64
    %p68 = pneg %p62
    %p69 = scmp.eq.s32.totalorder %s11, 1
    %p70 = por %p68, %p69
    %p71 = scmp.ne.s32.totalorder %s63, %s66
    %p72 = scmp.eq.s32.totalorder %s11, 0
    %p73 = por %p71, %p72
    %p74 = scmp.ne.s32.totalorder %s63, %s66
    %p75 = scmp.eq.s32.totalorder %s16, 1
    %p76 = por %p74, %p75
    %p77 = scmp.ne.s32.totalorder %s66, %s67
    %p78 = scmp.eq.s32.totalorder %s16, 0
    %p79 = por %p77, %p78
    %p80 = scmp.ne.s32.totalorder %s66, %s67
    %p81 = scmp.eq.s32.totalorder %s17, 1
    %p82 = por %p80, %p81
    %p84 = scmp.ne.s32.totalorder %s67, %s83
    %p85 = scmp.eq.s32.totalorder %s17, 0
    %p86 = por %p84, %p85
    %s87 = sadd.s32 %s18, %s19
    %s88 = sadd.s32 %s30, %s26
    %s89 = ssub.s32 %s87, %s88
    %p90 = scmp.eq.s32.totalorder %s89, 0
    %s92 = sadd.s32 %s91, 1
    %s93 = scalar_select %p90, %s91, %s92
    %p96 = pneg %p90
    %p97 = scmp.eq.s32.totalorder %s11, 1
    %p98 = por %p96, %p97
    %p99 = scmp.ne.s32.totalorder %s91, %s94
    %p100 = scmp.eq.s32.totalorder %s11, 0
    %p101 = por %p99, %p100
    %p102 = scmp.ne.s32.totalorder %s91, %s94
    %p103 = scmp.eq.s32.totalorder %s16, 1
    %p104 = por %p102, %p103
    %p105 = scmp.ne.s32.totalorder %s94, %s95
    %p106 = scmp.eq.s32.totalorder %s16, 0
    %p107 = por %p105, %p106
    %p108 = scmp.ne.s32.totalorder %s94, %s95
    %p109 = scmp.eq.s32.totalorder %s17, 1
    %p110 = por %p108, %p109
    %p112 = scmp.ne.s32.totalorder %s95, %s111
    %p113 = scmp.eq.s32.totalorder %s17, 0
    %p114 = por %p112, %p113
    %s115 = ssub.s32 %s18, %s30
    %p116 = scmp.eq.s32.totalorder %s115, 0
    %s118 = sadd.s32 %s117, 1
    %s119 = scalar_select %p116, %s117, %s118
    %p122 = pneg %p116
    %p123 = scmp.eq.s32.totalorder %s11, 1
    %p124 = por %p122, %p123
    %p125 = scmp.ne.s32.totalorder %s117, %s120
    %p126 = scmp.eq.s32.totalorder %s11, 0
    %p127 = por %p125, %p126
    %p128 = scmp.ne.s32.totalorder %s117, %s120
    %p129 = scmp.eq.s32.totalorder %s16, 1
    %p130 = por %p128, %p129
    %p131 = scmp.ne.s32.totalorder %s120, %s121
    %p132 = scmp.eq.s32.totalorder %s16, 0
    %p133 = por %p131, %p132
    %p134 = scmp.ne.s32.totalorder %s120, %s121
    %p135 = scmp.eq.s32.totalorder %s17, 1
    %p136 = por %p134, %p135
    %p138 = scmp.ne.s32.totalorder %s121, %s137
    %p139 = scmp.eq.s32.totalorder %s17, 0
    %p140 = por %p138, %p139
    %p141 = scmp.le.s32.totalorder 1, %s11
    %p142 = scmp.lt.s32.totalorder %s11, 3
    %p143 = pnand %p141, %p142
    %p144 = pneg %p143
    // Predicated region
    $region9: #{_midam_step.1} parent=5 // pred_check
      _
    $region10: #{_midam_step.1} parent=5 // pred_check_branch
      %146 = sbr.rel (%p143) target = $region12
    $region11: #{_midam_step.1} parent=5 // pred_region
      %s147 = ssub.s32 %s11, 1
    $region12: #{_midam_step.1} parent=5 // pred_fallthru
      _
    %p148 = scmp.lt.s32.totalorder %s11, 2
    // Predicated region
    $region13: #{_midam_step.1} parent=5 // pred_check
      %p149 = pneg %p148
    $region14: #{_midam_step.1} parent=5 // pred_check_branch
      %151 = sbr.rel (%p149) target = $region16
    $region15: #{_midam_step.1} parent=5 // pred_region
      // Predicated region
      $region17: #{_midam_step.1} parent=15 // pred_check
        %p152 = pneg %p45
      $region18: #{_midam_step.1} parent=15 // pred_check_branch
        %154 = sbr.rel (%p152) target = $region20
      $region19: #{_midam_step.1} parent=15 // pred_region
        %s155 = sadd.s32 %s18, %s19
        %s156 = smul.u32 4, %s155
        %p157 = scmp.lt.s32.totalorder %s156, 7
        %s158 = scalar_select %p157, %s156, 7
        %s159 = smul.addr %s158, 8
        %s160 = scalar_lea.vmem %s1, %s159
        %s161 = sadd.s32 %s18, %s19
        %s162 = smul.u32 4, %s161
      $region20: #{_midam_step.1} parent=15 // pred_fallthru
        _
      // Predicated region
      $region21: #{_midam_step.1} parent=15 // pred_check
        %p163 = pneg %p73
      $region22: #{_midam_step.1} parent=15 // pred_check_branch
        %165 = sbr.rel (%p163) target = $region24
      $region23: #{_midam_step.1} parent=15 // pred_region
        %s166 = sadd.s32 %s18, %s19
        %s167 = smul.u32 4, %s166
        %p168 = scmp.lt.s32.totalorder %s167, 7
        %s169 = scalar_select %p168, %s167, 7
        %s170 = smul.addr %s169, 8
        %s171 = scalar_lea.vmem %s2, %s170
        %s172 = sadd.s32 %s18, %s19
        %s173 = smul.u32 4, %s172
      $region24: #{_midam_step.1} parent=15 // pred_fallthru
        _
      // Predicated region
      $region25: #{_midam_step.1} parent=15 // pred_check
        %p174 = pneg %p101
      $region26: #{_midam_step.1} parent=15 // pred_check_branch
        %176 = sbr.rel (%p174) target = $region28
      $region27: #{_midam_step.1} parent=15 // pred_region
        %s177 = sadd.s32 %s18, %s19
        %p178 = scmp.lt.s32.totalorder %s177, 1
        %s179 = scalar_select %p178, %s177, 1
        %s180 = smul.addr %s179, 8
        %s181 = scalar_lea.vmem %s3, %s180
        %s182 = sadd.s32 %s18, %s19
      $region28: #{_midam_step.1} parent=15 // pred_fallthru
        _
    $region16: #{_midam_step.1} parent=5 // pred_fallthru
      _
    %p183 = scmp.le.s32.totalorder 1, %s11
    %p184 = scmp.lt.s32.totalorder %s11, 3
    %p185 = pnand %p183, %p184
    %p186 = pneg %p185
    // Predicated region
    $region29: #{_midam_step.1} parent=5 // pred_check
      _
    $region30: #{_midam_step.1} parent=5 // pred_check_branch
      %188 = sbr.rel (%p185) target = $region32
    $region31: #{_midam_step.1} parent=5 // pred_region
      %s189 = ssub.s32 %s11, 1
      %s190 = sadd.s32 %s20, %s21
      %s191 = smul.u32 4, %s190
      %p192 = scmp.lt.s32.totalorder %s191, 7
      %s193 = scalar_select %p192, %s191, 7
      %s194 = smul.addr %s193, 8
      %s195 = scalar_lea.vmem %s1, %s194
      %p196 = pneg %p51
      %p197 = pneg %p48
      %s198 = sadd.s32 %s20, %s21
      %s199 = smul.u32 4, %s198
      %p200 = scmp.lt.s32.totalorder %s199, 7
      %s201 = scalar_select %p200, %s199, 7
      %s202 = smul.addr %s201, 8
      %s203 = scalar_lea.vmem %s2, %s202
      %p204 = pneg %p79
      %p205 = pneg %p76
      %s206 = sadd.s32 %s20, %s21
      %p207 = scmp.lt.s32.totalorder %s206, 1
      %s208 = scalar_select %p207, %s206, 1
      %s209 = smul.addr %s208, 8
      %s210 = scalar_lea.vmem %s3, %s209
      %p211 = pneg %p107
      %p212 = pneg %p104
      %p213 = pneg %p133
      %p214 = pneg %p130
      %s215 = smul.u32 2, %s20
      %p216 = scmp.lt.s32.totalorder %s215, 3
      %s217 = scalar_select %p216, %s215, 3
      %s218 = smul.addr %s217, 8
      %s219 = scalar_lea.vmem %s4, %s218
      %s220 = sadd.s32 %s20, %s21
      %s221 = smul.u32 4, %s220
      %p222 = scmp.lt.s32.totalorder %s221, 7
      %s223 = scalar_select %p222, %s221, 7
      %s224 = smul.addr %s223, 8
      %s225 = scalar_lea.vmem %s1, %s224
      %s226 = sadd.s32 %s20, %s21
      %s227 = smul.u32 4, %s226
      %s228 = sadd.s32 %s20, %s21
      %s229 = smul.u32 4, %s228
      %p230 = scmp.lt.s32.totalorder %s229, 7
      %s231 = scalar_select %p230, %s229, 7
      %s232 = smul.addr %s231, 8
      %s233 = scalar_lea.vmem %s2, %s232
      %s234 = sadd.s32 %s20, %s21
      %s235 = smul.u32 4, %s234
      %s236 = sadd.s32 %s20, %s21
      %p237 = scmp.lt.s32.totalorder %s236, 1
      %s238 = scalar_select %p237, %s236, 1
      %s239 = smul.addr %s238, 8
      %s240 = scalar_lea.vmem %s3, %s239
      %s241 = sadd.s32 %s20, %s21
      %s242 = smul.u32 2, %s20
      %p243 = scmp.lt.s32.totalorder %s242, 3
      %s244 = scalar_select %p243, %s242, 3
      %s245 = smul.addr %s244, 8
      %s246 = scalar_lea.vmem %s4, %s245
      %s247 = smul.u32 2, %s20
      %s248 = sld [smem:[#allocation3]]
      %v249 = vld [vmem:[%s233] sm:$0xff]
      %v250 = vld [vmem:[%s233 + $0x8] sm:$0xff]
      %v251 = vld [vmem:[%s233 + $0x10] sm:$0xff]
      %v252 = vld [vmem:[%s233 + $0x18] sm:$0xff]
      %s253 = ssub.f32 1.0, %s248
      %v254 = vld [vmem:[%s225] sm:$0xff]
      %v255 = vld [vmem:[%s225 + $0x8] sm:$0xff]
      %v256 = vld [vmem:[%s225 + $0x10] sm:$0xff]
      %v257 = vld [vmem:[%s225 + $0x18] sm:$0xff]
      %v258 = vstv %s253
      %v259 = vmul.f32 %v258, %v254
      %v260 = vmul.f32 %v258, %v255
      %v261 = vmul.f32 %v258, %v256
      %v262 = vmul.f32 %v258, %v257
      %v263 = vstv %s248
      %v264 = vmul.f32 %v263, %v249
      %v265 = vmul.f32 %v263, %v250
      %v266 = vmul.f32 %v263, %v251
      %v267 = vmul.f32 %v263, %v252
      %v268 = vadd.f32 %v259, %v264
      %v269 = vadd.f32 %v260, %v265
      %v270 = vadd.f32 %v261, %v266
      %v271 = vadd.f32 %v262, %v267
      %v272 = vrcp.pop %v268
      %v273 = vmul.f32 %v249, %v272
      %v274 = vrcp.pop %v269
      %v275 = vmul.f32 %v250, %v274
      %v276 = vrcp.pop %v270
      %v277 = vmul.f32 %v251, %v276
      %v278 = vrcp.pop %v271
      %v279 = vmul.f32 %v252, %v278
      %v280 = vlog2.pop %v268
      %v281 = vmul.f32 %v280, 0.6931472
      %v282 = vlog2.pop %v269
      %v283 = vmul.f32 %v282, 0.6931472
      %v284 = vlog2.pop %v270
      %v285 = vmul.f32 %v284, 0.6931472
      %v286 = vlog2.pop %v271
      %v287 = vmul.f32 %v286, 0.6931472
      %v288 = vld [vmem:[%s240] sm:$0xff]
      %v289 = vunpack.c.0.s8 %v288
      %v290 = vunpack.c.1.s8 %v288
      %v291 = vunpack.c.2.s8 %v288
      %v292 = vunpack.c.3.s8 %v288
      %v293 = vcvt.s32.f32 %v289
      %v294 = vcvt.s32.f32 %v290
      %v295 = vcvt.s32.f32 %v291
      %v296 = vcvt.s32.f32 %v292
      %vm297 = vcmp.eq.f32.partialorder %v293, 1.0
      %vm298 = vcmp.eq.f32.partialorder %v294, 1.0
      %vm299 = vcmp.eq.f32.partialorder %v295, 1.0
      %vm300 = vcmp.eq.f32.partialorder %v296, 1.0
      %v301 = vsel %vm297, 1.0, 0.0
      %v302 = vsel %vm298, 1.0, 0.0
      %v303 = vsel %vm299, 1.0, 0.0
      %v304 = vsel %vm300, 1.0, 0.0
      %vm305 = vcmp.eq.f32.partialorder %v293, 0.0
      %vm306 = vcmp.eq.f32.partialorder %v294, 0.0
      %vm307 = vcmp.eq.f32.partialorder %v295, 0.0
      %vm308 = vcmp.eq.f32.partialorder %v296, 0.0
      %v309 = vsel %vm305, 1.0, 0.0
      %v310 = vsel %vm306, 1.0, 0.0
      %v311 = vsel %vm307, 1.0, 0.0
      %v312 = vsel %vm308, 1.0, 0.0
      %v313 = vmul.f32 %v301, %v273
      %v314 = vmul.f32 %v302, %v275
      %v315 = vmul.f32 %v303, %v277
      %v316 = vmul.f32 %v304, %v279
      %v317 = vmul.f32 %v309, %v273
      %v318 = vmul.f32 %v310, %v275
      %v319 = vmul.f32 %v311, %v277
      %v320 = vmul.f32 %v312, %v279
      %v321 = vmul.f32 %v301, %v281
      %v322 = vmul.f32 %v302, %v283
      %v323 = vmul.f32 %v303, %v285
      %v324 = vmul.f32 %v304, %v287
      %v325 = vmul.f32 %v309, %v281
      %v326 = vmul.f32 %v310, %v283
      %v327 = vmul.f32 %v311, %v285
      %v328 = vmul.f32 %v312, %v287
      %v329 = vadd.f32 %v301, %v302
      %v330 = vadd.f32 %v329, %v303
      %v331 = vadd.f32 %v330, %v304
      %v332 = vrot.slane %v331, 4
      %v333 = vadd.f32 %v331, %v332
      %v334 = vrot.slane %v333, 2
      %v335 = vadd.f32 %v333, %v334
      %v336 = vrot.slane %v335, 1
      %v337 = vadd.f32 %v335, %v336
      %v338 = vadd.f32 %v309, %v310
      %v339 = vadd.f32 %v338, %v311
      %v340 = vadd.f32 %v339, %v312
      %v341 = vrot.slane %v340, 4
      %v342 = vadd.f32 %v340, %v341
      %v343 = vrot.slane %v342, 2
      %v344 = vadd.f32 %v342, %v343
      %v345 = vrot.slane %v344, 1
      %v346 = vadd.f32 %v344, %v345
      %v347 = vadd.f32 %v313, %v314
      %v348 = vadd.f32 %v347, %v315
      %v349 = vadd.f32 %v348, %v316
      %v350 = vrot.slane %v349, 4
      %v351 = vadd.f32 %v349, %v350
      %v352 = vrot.slane %v351, 2
      %v353 = vadd.f32 %v351, %v352
      %v354 = vrot.slane %v353, 1
      %v355 = vadd.f32 %v353, %v354
      %v356 = vadd.f32 %v317, %v318
      %v357 = vadd.f32 %v356, %v319
      %v358 = vadd.f32 %v357, %v320
      %v359 = vrot.slane %v358, 4
      %v360 = vadd.f32 %v358, %v359
      %v361 = vrot.slane %v360, 2
      %v362 = vadd.f32 %v360, %v361
      %v363 = vrot.slane %v362, 1
      %v364 = vadd.f32 %v362, %v363
      %v365 = vmul.f32 %v313, %v281
      %v366 = vmul.f32 %v314, %v283
      %v367 = vmul.f32 %v315, %v285
      %v368 = vmul.f32 %v316, %v287
      %v369 = vadd.f32 %v365, %v366
      %v370 = vadd.f32 %v369, %v367
      %v371 = vadd.f32 %v370, %v368
      %v372 = vrot.slane %v371, 4
      %v373 = vadd.f32 %v371, %v372
      %v374 = vrot.slane %v373, 2
      %v375 = vadd.f32 %v373, %v374
      %v376 = vrot.slane %v375, 1
      %v377 = vadd.f32 %v375, %v376
      %v378 = vmul.f32 %v317, %v281
      %v379 = vmul.f32 %v318, %v283
      %v380 = vmul.f32 %v319, %v285
      %v381 = vmul.f32 %v320, %v287
      %v382 = vadd.f32 %v378, %v379
      %v383 = vadd.f32 %v382, %v380
      %v384 = vadd.f32 %v383, %v381
      %v385 = vrot.slane %v384, 4
      %v386 = vadd.f32 %v384, %v385
      %v387 = vrot.slane %v386, 2
      %v388 = vadd.f32 %v386, %v387
      %v389 = vrot.slane %v388, 1
      %v390 = vadd.f32 %v388, %v389
      %v391 = vadd.f32 %v321, %v322
      %v392 = vadd.f32 %v391, %v323
      %v393 = vadd.f32 %v392, %v324
      %v394 = vrot.slane %v393, 4
      %v395 = vadd.f32 %v393, %v394
      %v396 = vrot.slane %v395, 2
      %v397 = vadd.f32 %v395, %v396
      %v398 = vrot.slane %v397, 1
      %v399 = vadd.f32 %v397, %v398
      %v400 = vadd.f32 %v325, %v326
      %v401 = vadd.f32 %v400, %v327
      %v402 = vadd.f32 %v401, %v328
      %v403 = vrot.slane %v402, 4
      %v404 = vadd.f32 %v402, %v403
      %v405 = vrot.slane %v404, 2
      %v406 = vadd.f32 %v404, %v405
      %v407 = vrot.slane %v406, 1
      %v408 = vadd.f32 %v406, %v407
      %v409 = vmul.f32 %v321, %v281
      %v410 = vmul.f32 %v322, %v283
      %v411 = vmul.f32 %v323, %v285
      %v412 = vmul.f32 %v324, %v287
      %v413 = vadd.f32 %v409, %v410
      %v414 = vadd.f32 %v413, %v411
      %v415 = vadd.f32 %v414, %v412
      %v416 = vrot.slane %v415, 4
      %v417 = vadd.f32 %v415, %v416
      %v418 = vrot.slane %v417, 2
      %v419 = vadd.f32 %v417, %v418
      %v420 = vrot.slane %v419, 1
      %v421 = vadd.f32 %v419, %v420
      %v422 = vmul.f32 %v325, %v281
      %v423 = vmul.f32 %v326, %v283
      %v424 = vmul.f32 %v327, %v285
      %v425 = vmul.f32 %v328, %v287
      %v426 = vadd.f32 %v422, %v423
      %v427 = vadd.f32 %v426, %v424
      %v428 = vadd.f32 %v427, %v425
      %v429 = vrot.slane %v428, 4
      %v430 = vadd.f32 %v428, %v429
      %v431 = vrot.slane %v430, 2
      %v432 = vadd.f32 %v430, %v431
      %v433 = vrot.slane %v432, 1
      %v434 = vadd.f32 %v432, %v433
      %vm435 = vcmask 1040384
      %v436 = vsel %vm435, %v337, %v346
      %vm437 = vcmask 1041408
      %v438 = vsel %vm437, %v436, %v355
      %vm439 = vcmask 1042432
      %v440 = vsel %vm439, %v438, %v364
      %vm441 = vcmask 1043456
      %v442 = vsel %vm441, %v440, %v377
      %vm443 = vcmask 1044480
      %v444 = vsel %vm443, %v442, %v390
      %vm445 = vcmask 1045504
      %v446 = vsel %vm445, %v444, %v399
      %vm447 = vcmask 1046528
      %v448 = vsel %vm447, %v446, %v408
      %v449 = vsel %vm435, %v421, %v434
      %v450 = vsel %vm437, %v449, 0.0
      %p451 = scmp.eq.s32.totalorder %s21, 0
      // Predicated region
      $region33: #{_midam_step.1} parent=31 // pred_check
        %p452 = pneg %p451
      $region34: #{_midam_step.1} parent=31 // pred_check_branch
        %454 = sbr.rel (%p452) target = $region36
      $region35: #{_midam_step.1} parent=31 // pred_region
        %455 = vst [vmem:[%s246] sm:$0xff] 0.0
        %456 = vst [vmem:[%s246 + $0x8] sm:$0xff] 0.0
      $region36: #{_midam_step.1} parent=31 // pred_fallthru
        _
      %v457 = vld [vmem:[%s246] sm:$0xff]
      %v458 = vld [vmem:[%s246 + $0x8] sm:$0xff]
      %v459 = vadd.f32 %v457, %v448
      %v460 = vadd.f32 %v458, %v450
      %461 = vst [vmem:[%s246] sm:$0xff] %v459
      %462 = vst [vmem:[%s246 + $0x8] sm:$0xff] %v460
      %s463 = smul.u32 2, %s20
      %p464 = scmp.lt.s32.totalorder %s463, 3
      %s465 = scalar_select %p464, %s463, 3
      %s466 = smul.addr %s465, 8
      %s467 = scalar_lea.vmem %s4, %s466
      // Predicated region
      $region37: #{_midam_step.1} parent=31 // pred_check
        %p468 = pneg %p130
      $region38: #{_midam_step.1} parent=31 // pred_check_branch
        %470 = sbr.rel (%p468) target = $region40
      $region39: #{_midam_step.1} parent=31 // pred_region
        %s471 = smul.u32 2, %s20
      $region40: #{_midam_step.1} parent=31 // pred_fallthru
        _
    $region32: #{_midam_step.1} parent=5 // pred_fallthru
      _
    %p472 = scmp.le.s32.totalorder 2, %s11
    // Predicated region
    $region41: #{_midam_step.1} parent=5 // pred_check
      %p473 = pneg %p472
    $region42: #{_midam_step.1} parent=5 // pred_check_branch
      %475 = sbr.rel (%p473) target = $region44
    $region43: #{_midam_step.1} parent=5 // pred_region
      %s476 = ssub.s32 %s11, 2
      // Predicated region
      $region45: #{_midam_step.1} parent=43 // pred_check
        %p477 = pneg %p136
      $region46: #{_midam_step.1} parent=43 // pred_check_branch
        %479 = sbr.rel (%p477) target = $region48
      $region47: #{_midam_step.1} parent=43 // pred_region
        %s480 = smul.u32 2, %s22
        %p481 = scmp.lt.s32.totalorder %s480, 3
        %s482 = scalar_select %p481, %s480, 3
        %s483 = smul.addr %s482, 8
        %s484 = scalar_lea.vmem %s4, %s483
      $region48: #{_midam_step.1} parent=43 // pred_fallthru
        _
    $region44: #{_midam_step.1} parent=5 // pred_fallthru
      _
  $region6: #{_midam_step.1} parent=0 // loop_footer
    %s15 = sadd.s32 1, %s11
  $region7: #{_midam_step.1} parent=0 // loop_footer_branch
    %10 = sbr.rel target = $region3
  $region8: #{_midam_step.1} parent=0 // loop_exit
    _

</llo_original>
